<compile_context>
chip_gen: v6e
topology: v6e:2x2x1
jax: 0.10.0
libtpu: 0.0.40
codegen_flags: <defaults>
</compile_context>

<pallas_src>
import functools

import jax
import jax.numpy as jnp
from jax.experimental import pallas as pl
from jax.experimental.pallas import tpu as pltpu

LANES = 128      # vreg lane width
SUBLANES = 8     # vreg sublane count (f32)


def _round_up(x, m):
    return (x + m - 1) // m * m


def prepare_params(w1, b1, w2, b2):
    """Pack transposed + zero-padded params into one lane-dense f32 blob.

    Call ONCE at parameter-init time (not per forward call).
      w1: (H, I), b1: (H,), w2: (O, H), b2: (O,)
    Returns (blob[(rows, width)], meta dict with static offsets/sizes).
    """
    num_hidden, num_input = w1.shape
    num_output = w2.shape[0]
    width = _round_up(max(num_hidden, num_output), LANES)   # shared lane width

    # Sublane-aligned row layout inside the blob (static offsets).
    off_w1 = 0
    off_b1 = _round_up(num_input, SUBLANES)
    off_w2 = off_b1 + SUBLANES
    off_b2 = off_w2 + width              # w2^T stored with `width` (zero-padded) rows
    rows = off_b2 + SUBLANES

    blob = jnp.zeros((rows, width), jnp.float32)
    # Zero padding is inert: padded hidden cols give tanh(0)=0, padded w2 rows
    # contribute nothing, padded output cols are never stored.
    blob = blob.at[off_w1:off_w1 + num_input, :num_hidden].set(w1.T.astype(jnp.float32))
    blob = blob.at[off_b1, :num_hidden].set(b1.astype(jnp.float32))
    blob = blob.at[off_w2:off_w2 + num_hidden, :num_output].set(w2.T.astype(jnp.float32))
    blob = blob.at[off_b2, :num_output].set(b2.astype(jnp.float32))

    meta = dict(num_input=num_input, num_hidden=num_hidden, num_output=num_output,
                width=width, rows=rows, off_b1=off_b1, off_w2=off_w2, off_b2=off_b2)
    return blob, meta


def _mlp_kernel(x_ref, p_ref, o_ref, *, ni, width, no, off_b1, off_w2, off_b2):
    # Static, sublane-aligned slices into the single packed parameter blob.
    w1 = p_ref[0:ni, :]                         # (I,     W)
    b1 = p_ref[off_b1:off_b1 + 1, :]            # (1,     W)
    w2 = p_ref[off_w2:off_w2 + width, :]        # (W,     W)  zero rows beyond H
    b2 = p_ref[off_b2:off_b2 + 1, :]            # (1,     W)

    # layer1: Linear (MXU, f32 accumulate) -> layer2: Tanh (EUP slot, f32).
    h = jnp.tanh(jnp.dot(x_ref[...], w1, preferred_element_type=jnp.float32) + b1)
    # layer3: Linear (zero-padded hidden rows of w2 contribute nothing).
    y = jnp.dot(h, w2, preferred_element_type=jnp.float32) + b2
    # Narrow store: only the real output columns leave VMEM (8 B/row in HBM).
    o_ref[...] = y[:, :no].astype(o_ref.dtype)


def module_net_forward(x, blob, meta, *, tile_b=2048):
    """x: (B, num_input) f32; blob/meta from prepare_params. Returns (B, num_output)."""
    B, ni = x.shape
    assert ni == meta["num_input"]
    no = meta["num_output"]
    width = meta["width"]
    rows = meta["rows"]

    # Batch tile: as large as requested, sublane-aligned, but capped so large
    # batches keep >=4 grid steps (>=2 per v7x TensorCore under "parallel").
    tb = max(SUBLANES, min(tile_b, _round_up(pl.cdiv(B, 4), SUBLANES)))
    grid = (pl.cdiv(B, tb),)   # partial trailing block handled by Pallas (no pad/slice)

    # VMEM budget: double-buffered x/out tiles + resident param blob (x2 for
    # default pipelining) + f32 intermediates h/y (tb, width).  Cap at 32 MiB,
    # safe on every generation (v7x physical VMEM is 64 MiB).
    est = 4 * (2 * tb * ni + 2 * tb * no + 2 * rows * width + 6 * tb * width)
    vmem_limit = int(min(32 << 20, max(16 << 20, 2 * est)))

    kernel = functools.partial(
        _mlp_kernel, ni=ni, width=width, no=no,
        off_b1=meta["off_b1"], off_w2=meta["off_w2"], off_b2=meta["off_b2"])

    return pl.pallas_call(
        kernel,
        out_shape=jax.ShapeDtypeStruct((B, no), x.dtype),
        grid=grid,
        in_specs=[
            pl.BlockSpec((tb, ni), lambda i: (i, 0)),        # activation tile (pipelined)
            pl.BlockSpec((rows, width), lambda i: (0, 0)),   # packed params (VMEM-resident)
        ],
        out_specs=pl.BlockSpec((tb, no), lambda i: (i, 0)),  # narrow output tile
        compiler_params=pltpu.CompilerParams(
            dimension_semantics=("parallel",),               # megacore-shardable batch axis
            vmem_limit_bytes=vmem_limit),
    )(x, blob)


def module_net_reference(x, w1, b1, w2, b2):
    h = jnp.tanh(x @ w1.T + b1)
    return h @ w2.T + b2


if __name__ == "__main__":
    # Small shapes consistent with the "polar rose" MLP.
    B, num_input, num_hidden, num_output = 8, 4, 32, 2

    key = jax.random.PRNGKey(0)
    kx, kw1, kb1, kw2, kb2 = jax.random.split(key, 5)

    x = jax.random.normal(kx, (B, num_input), dtype=jnp.float32)
    w1 = jax.random.normal(kw1, (num_hidden, num_input), dtype=jnp.float32) * 0.1
    b1 = jax.random.normal(kb1, (num_hidden,), dtype=jnp.float32) * 0.1
    w2 = jax.random.normal(kw2, (num_output, num_hidden), dtype=jnp.float32) * 0.1
    b2 = jax.random.normal(kb2, (num_output,), dtype=jnp.float32) * 0.1

    blob, meta = prepare_params(w1, b1, w2, b2)   # one-time packing

    # Tiny demo batch (single grid step).
    out = jax.block_until_ready(module_net_forward(x, blob, meta))
    ref = module_net_reference(x, w1, b1, w2, b2)
    assert out.shape == (B, num_output)
    assert jnp.allclose(out, ref, atol=1e-5, rtol=1e-5)

    # Larger non-multiple batch: multi-step grid with a partial trailing block
    # (exercises the no-pad / dropped-OOB-write path).
    B2 = 300
    x2 = jax.random.normal(jax.random.PRNGKey(1), (B2, num_input), dtype=jnp.float32)
    out2 = jax.block_until_ready(module_net_forward(x2, blob, meta, tile_b=128))
    ref2 = module_net_reference(x2, w1, b1, w2, b2)
    assert out2.shape == (B2, num_output)
    assert jnp.allclose(out2, ref2, atol=1e-5, rtol=1e-5)

    print("KERNEL_OK")
</pallas_src>

<mosaic_0001>
module attributes {stable_mosaic.version = 11 : i64} {
  func.func @_mlp_kernel(%arg0: i32, %arg1: memref<8x4xf32, #tpu.memory_space<vmem>>, %arg2: memref<152x128xf32, #tpu.memory_space<vmem>>, %arg3: memref<8x2xf32, #tpu.memory_space<vmem>>) attributes {dimension_semantics = [#tpu.dimension_semantics<parallel>], iteration_bounds = array<i64: 1>, scalar_prefetch = 0 : i64, scratch_operands = 0 : i64, tpu.core_type = #tpu.core_type<tc>, window_params = [{transform_indices = @transform_0, window_bounds = array<i64: 8, 4>}, {pipeline_mode = #tpu.pipeline_mode<synchronous>, transform_indices = @transform_1, window_bounds = array<i64: 152, 128>}, {transform_indices = @transform_2, window_bounds = array<i64: 8, 2>}]} {
    %c0 = arith.constant 0 : index
    %c0_0 = arith.constant 0 : index
    %0 = vector.load %arg2[%c0, %c0_0] : memref<152x128xf32, #tpu.memory_space<vmem>>, vector<4x128xf32>
    %c8 = arith.constant 8 : index
    %c0_1 = arith.constant 0 : index
    %1 = vector.load %arg2[%c8, %c0_1] : memref<152x128xf32, #tpu.memory_space<vmem>>, vector<1x128xf32>
    %c16 = arith.constant 16 : index
    %c0_2 = arith.constant 0 : index
    %2 = vector.load %arg2[%c16, %c0_2] : memref<152x128xf32, #tpu.memory_space<vmem>>, vector<128x128xf32>
    %c144 = arith.constant 144 : index
    %c0_3 = arith.constant 0 : index
    %3 = vector.load %arg2[%c144, %c0_3] : memref<152x128xf32, #tpu.memory_space<vmem>>, vector<1x128xf32>
    %c0_4 = arith.constant 0 : index
    %c0_5 = arith.constant 0 : index
    %4 = vector.load %arg1[%c0_4, %c0_5] : memref<8x4xf32, #tpu.memory_space<vmem>>, vector<8x4xf32>
    %cst = arith.constant dense<0.000000e+00> : vector<8x128xf32>
    %5 = tpu.matmul %4, %0, %cst {dimension_numbers = #tpu.dot_dimension_numbers<[1], [0], [0], [1], [0, 0, 1, 1], [], []>} : vector<8x4xf32>, vector<4x128xf32>, vector<8x128xf32> -> vector<8x128xf32>
    %6 = vector.broadcast %1 : vector<1x128xf32> to vector<8x128xf32>
    %7 = arith.addf %5, %6 : vector<8x128xf32>
    %8 = math.tanh %7 : vector<8x128xf32>
    %cst_6 = arith.constant dense<0.000000e+00> : vector<8x128xf32>
    %9 = tpu.matmul %8, %2, %cst_6 {dimension_numbers = #tpu.dot_dimension_numbers<[1], [0], [0], [1], [0, 0, 1, 1], [], []>} : vector<8x128xf32>, vector<128x128xf32>, vector<8x128xf32> -> vector<8x128xf32>
    %10 = vector.broadcast %3 : vector<1x128xf32> to vector<8x128xf32>
    %11 = arith.addf %9, %10 : vector<8x128xf32>
    %12 = vector.extract_strided_slice %11 {offsets = [0, 0], sizes = [8, 2], strides = [1, 1]} : vector<8x128xf32> to vector<8x2xf32>
    %c0_7 = arith.constant 0 : index
    %c0_8 = arith.constant 0 : index
    %13 = vector.load %arg3[%c0_7, %c0_8] : memref<8x2xf32, #tpu.memory_space<vmem>>, vector<8x2xf32>
    tpu.vector_store %arg3[%c0_7, %c0_8], %12 {strides = array<i32>} : memref<8x2xf32, #tpu.memory_space<vmem>>, vector<8x2xf32>,
    return
  }
  func.func @transform_0(%arg0: i32) -> (i32, i32) {
    %c0_i32 = arith.constant 0 : i32
    %c0_i32_0 = arith.constant 0 : i32
    return %arg0, %c0_i32 : i32, i32
  }
  func.func @transform_1(%arg0: i32) -> (i32, i32) {
    %c0_i32 = arith.constant 0 : i32
    %c0_i32_0 = arith.constant 0 : i32
    %c0_i32_1 = arith.constant 0 : i32
    return %c0_i32, %c0_i32_0 : i32, i32
  }
  func.func @transform_2(%arg0: i32) -> (i32, i32) {
    %c0_i32 = arith.constant 0 : i32
    %c0_i32_0 = arith.constant 0 : i32
    return %arg0, %c0_i32 : i32, i32
  }
}

</mosaic_0001>

<llo_original>
// kernel: tpu_custom_call.1
$region0: #{tpu_custom_call.1}
  #allocation0 [shape = 'u32[]', space=smem, size = 0x4, offset = 0x4, fixed_abs, tag = 'smem constant byte address 0x4 - core index']
  #allocation1 [shape = 'u32[144,128]{1,0:T(1,128)}', space=vmem, size = 0x12000, scoped, tag = 'internal scratch']
  %s0 = inlined_call_operand.vmem [shape: f32[8,4], index: 0, kind: input, shape index: {}]
  %s1 = inlined_call_operand.hbm [shape: f32[152,128], index: 1, kind: input, shape index: {}]
  %s2 = inlined_call_operand.vmem [shape: f32[8,2], index: 2, kind: output, shape index: {}]
  %s3 = sld [smem:[#allocation0]]
  $region22: #{tpu_custom_call.1} parent=0
    _
  %s5 = ssub.s32 1, %s3
  %s6 = scalar_select 0, %s5, %s3
  $region1: #{tpu_custom_call.1} parent=0
    #allocation2 [shape = 'u8[77824]{0}', space=vmem, size = 0x13000, scoped, tag = 'input window, operand 1, single buffered']
    #allocation3 [shape = 's32[1]{0}', space=sflag, size = 0x4, scoped, tag = 'scoped memory for tpu_custom_call.1']
    %7 = vsyncpa [#allocation3], 0
    // Predicated region
    $region2: #{tpu_custom_call.1} parent=1 // pred_check
      _
    $region3: #{tpu_custom_call.1} parent=1 // pred_check_branch
      %9 = sbr.rel (0) target = $region5
    $region4: #{tpu_custom_call.1} parent=1 // pred_region
      _
    $region5: #{tpu_custom_call.1} parent=1 // pred_fallthru
      _
    // Predicated region
    $region6: #{tpu_custom_call.1} parent=1 // pred_check
      _
    $region7: #{tpu_custom_call.1} parent=1 // pred_check_branch
      %11 = sbr.rel (0) target = $region9
    $region8: #{tpu_custom_call.1} parent=1 // pred_region
      %s13 = ssub.s32 2432, 2432
      %14 = vsyncadd [#allocation3], %s13
      %s15 = sshll.u32 [#allocation2], 4
      %s16 = int_to_ptr.vmem [resolvable:$true] %s15
      %21 = dma.hbm_to_vmem [thread:$0]  %s1, 2432, %s16, [#allocation3], 128, 128, 8
    $region9: #{tpu_custom_call.1} parent=1 // pred_fallthru
      _
    // Predicated region
    $region10: #{tpu_custom_call.1} parent=1 // pred_check
      _
    $region11: #{tpu_custom_call.1} parent=1 // pred_check_branch
      %23 = sbr.rel (0) target = $region13
    $region12: #{tpu_custom_call.1} parent=1 // pred_region
      %24 = dma.done [#allocation3], 2432
    $region13: #{tpu_custom_call.1} parent=1 // pred_fallthru
      _
    %v25 = vld [vmem:[#allocation2] sm:$0xf]
    %v26 = vld [vmem:[#allocation2 + $0x8] sm:$0x1]
    %v27 = vld [vmem:[#allocation2 + $0x10] sm:$0xff]
    %v28 = vld [vmem:[#allocation2 + $0x18] sm:$0xff]
    %v29 = vld [vmem:[#allocation2 + $0x20] sm:$0xff]
    %v30 = vld [vmem:[#allocation2 + $0x28] sm:$0xff]
    %v31 = vld [vmem:[#allocation2 + $0x30] sm:$0xff]
    %v32 = vld [vmem:[#allocation2 + $0x38] sm:$0xff]
    %v33 = vld [vmem:[#allocation2 + $0x40] sm:$0xff]
    %v34 = vld [vmem:[#allocation2 + $0x48] sm:$0xff]
    %v35 = vld [vmem:[#allocation2 + $0x50] sm:$0xff]
    %v36 = vld [vmem:[#allocation2 + $0x58] sm:$0xff]
    %v37 = vld [vmem:[#allocation2 + $0x60] sm:$0xff]
    %v38 = vld [vmem:[#allocation2 + $0x68] sm:$0xff]
    %v39 = vld [vmem:[#allocation2 + $0x70] sm:$0xff]
    %v40 = vld [vmem:[#allocation2 + $0x78] sm:$0xff]
    %v41 = vld [vmem:[#allocation2 + $0x80] sm:$0xff]
    %v42 = vld [vmem:[#allocation2 + $0x88] sm:$0xff]
    %v43 = vld [vmem:[#allocation2 + $0x90] sm:$0x1]
    %v44 = vld [vmem:[%s0] sm:$0xff]
    %v45 = vlaneseq
    %v46 = vshrl.u32 %v45, 7
    %v47 = vsub.s32 0, %v46
    %v48 = vrot.slane %v26, %v47
    %vm49 = vcmask 31744
    %v51 = vsel %vm49, %v44, 0
    %vm53 = vcmask 1043456
    %v55 = vsel %vm53, %v25, 0
    %57 = vmatprep.subr.mxu0 0.0
    %58 = vmatpush1.msra.mxu0 0.0
    %59 = vmatprep.subr.mxu0 0.0
    %60 = vmatpush1.msra.mxu0 0.0
    %61 = vmatprep.subr.mxu0 0.0
    %62 = vmatpush1.msra.mxu0 0.0
    %63 = vmatprep.subr.mxu0 0.0
    %64 = vmatpush1.msra.mxu0 0.0
    %65 = vmatprep.subr.mxu0 0.0
    %66 = vmatpush1.msra.mxu0 0.0
    %67 = vmatprep.subr.mxu0 0.0
    %68 = vmatpush1.msra.mxu0 0.0
    %69 = vmatprep.subr.mxu0 0.0
    %70 = vmatpush1.msra.mxu0 0.0
    %71 = vmatprep.subr.mxu0 0.0
    %72 = vmatpush1.msra.mxu0 0.0
    %73 = vmatprep.subr.mxu0 0.0
    %74 = vmatpush1.msra.mxu0 0.0
    %75 = vmatprep.subr.mxu0 0.0
    %76 = vmatpush1.msra.mxu0 0.0
    %77 = vmatprep.subr.mxu0 0.0
    %78 = vmatpush1.msra.mxu0 0.0
    %79 = vmatprep.subr.mxu0 0.0
    %80 = vmatpush1.msra.mxu0 0.0
    %81 = vmatprep.subr.mxu0 0.0
    %82 = vmatpush1.msra.mxu0 0.0
    %83 = vmatprep.subr.mxu0 0.0
    %84 = vmatpush1.msra.mxu0 0.0
    %85 = vmatprep.subr.mxu0 0.0
    %86 = vmatpush1.msra.mxu0 0.0
    %87 = vmatprep.subr.mxu0 0.0
    %88 = vmatpush1.msra.mxu0 %v55
    %89 = vmatprep.subr.mxu0 0.0
    %90 = vmatpush2.msra.mxu0 0.0
    %91 = vmatprep.subr.mxu0 0.0
    %92 = vmatpush2.msra.mxu0 0.0
    %93 = vmatprep.subr.mxu0 0.0
    %94 = vmatpush2.msra.mxu0 0.0
    %95 = vmatprep.subr.mxu0 0.0
    %96 = vmatpush2.msra.mxu0 0.0
    %97 = vmatprep.subr.mxu0 0.0
    %98 = vmatpush2.msra.mxu0 0.0
    %99 = vmatprep.subr.mxu0 0.0
    %100 = vmatpush2.msra.mxu0 0.0
    %101 = vmatprep.subr.mxu0 0.0
    %102 = vmatpush2.msra.mxu0 0.0
    %103 = vmatprep.subr.mxu0 0.0
    %104 = vmatpush2.msra.mxu0 0.0
    %105 = vmatprep.subr.mxu0 0.0
    %106 = vmatpush2.msra.mxu0 0.0
    %107 = vmatprep.subr.mxu0 0.0
    %108 = vmatpush2.msra.mxu0 0.0
    %109 = vmatprep.subr.mxu0 0.0
    %110 = vmatpush2.msra.mxu0 0.0
    %111 = vmatprep.subr.mxu0 0.0
    %112 = vmatpush2.msra.mxu0 0.0
    %113 = vmatprep.subr.mxu0 0.0
    %114 = vmatpush2.msra.mxu0 0.0
    %115 = vmatprep.subr.mxu0 0.0
    %116 = vmatpush2.msra.mxu0 0.0
    %117 = vmatprep.subr.mxu0 0.0
    %118 = vmatpush2.msra.mxu0 0.0
    %119 = vmatprep.subr.mxu0 0.0
    %120 = vmatpush2.msra.mxu0 0.0
    %121 = vmatprep.mubr.f32.mxu0 0.0
    %122 = vmatmul.mubr.f32.gmra.mxu0 %v51
    %v123 = vpop.f32.mrf.mxu0
    %v124 = vadd.f32 %v48, %v123
    %v125 = vpop.f32.mrf.mxu0
    %126 = vdwg.mxu0
    %v127 = vtanh.pop %v124
    %v128 = vlaneseq
    %v129 = vshrl.u32 %v128, 7
    %v130 = vsub.s32 0, %v129
    %v131 = vrot.slane %v43, %v130
    %132 = vmatprep.subr.mxu0 0.0
    %133 = vmatpush1.msra.mxu0 %v42
    %134 = vmatprep.subr.mxu0 0.0
    %135 = vmatpush1.msra.mxu0 %v41
    %136 = vmatprep.subr.mxu0 0.0
    %137 = vmatpush1.msra.mxu0 %v40
    %138 = vmatprep.subr.mxu0 0.0
    %139 = vmatpush1.msra.mxu0 %v39
    %140 = vmatprep.subr.mxu0 0.0
    %141 = vmatpush1.msra.mxu0 %v38
    %142 = vmatprep.subr.mxu0 0.0
    %143 = vmatpush1.msra.mxu0 %v37
    %144 = vmatprep.subr.mxu0 0.0
    %145 = vmatpush1.msra.mxu0 %v36
    %146 = vmatprep.subr.mxu0 0.0
    %147 = vmatpush1.msra.mxu0 %v35
    %148 = vmatprep.subr.mxu0 0.0
    %149 = vmatpush1.msra.mxu0 %v34
    %150 = vmatprep.subr.mxu0 0.0
    %151 = vmatpush1.msra.mxu0 %v33
    %152 = vmatprep.subr.mxu0 0.0
    %153 = vmatpush1.msra.mxu0 %v32
    %154 = vmatprep.subr.mxu0 0.0
    %155 = vmatpush1.msra.mxu0 %v31
    %156 = vmatprep.subr.mxu0 0.0
    %157 = vmatpush1.msra.mxu0 %v30
    %158 = vmatprep.subr.mxu0 0.0
    %159 = vmatpush1.msra.mxu0 %v29
    %160 = vmatprep.subr.mxu0 0.0
    %161 = vmatpush1.msra.mxu0 %v28
    %162 = vmatprep.subr.mxu0 0.0
    %163 = vmatpush1.msra.mxu0 %v27
    %164 = vmatprep.subr.mxu0 0.0
    %165 = vmatpush2.msra.mxu0 0.0
    %166 = vmatprep.subr.mxu0 0.0
    %167 = vmatpush2.msra.mxu0 0.0
    %168 = vmatprep.subr.mxu0 0.0
    %169 = vmatpush2.msra.mxu0 0.0
    %170 = vmatprep.subr.mxu0 0.0
    %171 = vmatpush2.msra.mxu0 0.0
    %172 = vmatprep.subr.mxu0 0.0
    %173 = vmatpush2.msra.mxu0 0.0
    %174 = vmatprep.subr.mxu0 0.0
    %175 = vmatpush2.msra.mxu0 0.0
    %176 = vmatprep.subr.mxu0 0.0
    %177 = vmatpush2.msra.mxu0 0.0
    %178 = vmatprep.subr.mxu0 0.0
    %179 = vmatpush2.msra.mxu0 0.0
    %180 = vmatprep.subr.mxu0 0.0
    %181 = vmatpush2.msra.mxu0 0.0
    %182 = vmatprep.subr.mxu0 0.0
    %183 = vmatpush2.msra.mxu0 0.0
    %184 = vmatprep.subr.mxu0 0.0
    %185 = vmatpush2.msra.mxu0 0.0
    %186 = vmatprep.subr.mxu0 0.0
    %187 = vmatpush2.msra.mxu0 0.0
    %188 = vmatprep.subr.mxu0 0.0
    %189 = vmatpush2.msra.mxu0 0.0
    %190 = vmatprep.subr.mxu0 0.0
    %191 = vmatpush2.msra.mxu0 0.0
    %192 = vmatprep.subr.mxu0 0.0
    %193 = vmatpush2.msra.mxu0 0.0
    %194 = vmatprep.subr.mxu0 0.0
    %195 = vmatpush2.msra.mxu0 0.0
    %196 = vmatprep.mubr.f32.mxu0 0.0
    %197 = vmatmul.mubr.f32.gmra.mxu0 %v127
    %v198 = vpop.f32.mrf.mxu0
    %v199 = vadd.f32 %v131, %v198
    %v200 = vpop.f32.mrf.mxu0
    %201 = vdwg.mxu0
    %vm202 = vcmask 15360
    %203 = vst.msk [vmem:[%s2] sm:$0xff] %vm202, %v199
    // Predicated region
    $region14: #{tpu_custom_call.1} parent=1 // pred_check
      _
    $region15: #{tpu_custom_call.1} parent=1 // pred_check_branch
      %205 = sbr.rel (0) target = $region17
    $region16: #{tpu_custom_call.1} parent=1 // pred_region
      _
    $region17: #{tpu_custom_call.1} parent=1 // pred_fallthru
      _
    // Predicated region
    $region18: #{tpu_custom_call.1} parent=1 // pred_check
      _
    $region19: #{tpu_custom_call.1} parent=1 // pred_check_branch
      %207 = sbr.rel (0) target = $region21
    $region20: #{tpu_custom_call.1} parent=1 // pred_region
      _
    $region21: #{tpu_custom_call.1} parent=1 // pred_fallthru
      _
    %208 = vsyncpa [#allocation3], 1

</llo_original>
